<compile_context>
chip_gen: v7x
topology: tpu7x:2x2x1
jax: 0.10.0
libtpu: 0.0.40
codegen_flags: <defaults>
</compile_context>

<pallas_src>
import jax
import jax.numpy as jnp
from jax.experimental import pallas as pl
from jax.experimental.pallas import tpu as pltpu


def edge_decoder_kernel(z_ref, w1_ref, b1_ref, w2_ref, b2_ref, o_ref):
    # z_ref : [2H, TE]  (features on sublanes, edges on lanes)
    # w1_ref: [H, 2H]   b1_ref: [H, 1]
    # w2_ref: [H, 1]    b2_ref: [1, 1] (SMEM scalar)
    # o_ref : [1, TE]
    h = jnp.dot(w1_ref[...], z_ref[...],
                preferred_element_type=jnp.float32)          # [H, TE]  (MXU)
    h = jax.nn.sigmoid(h + b1_ref[...])                      # lane-broadcast bias, VPU/EUP
    o = jnp.sum(h * w2_ref[...], axis=0, keepdims=True)      # lin2 as VPU mul + sublane reduce
    o_ref[...] = (o + b2_ref[0, 0]).astype(o_ref.dtype)


def init_edge_decoder_params(key, hidden_channels):
    """Deterministic init matching torch.nn.Linear shapes (uniform +-1/sqrt(fan_in))."""
    H = hidden_channels
    k1, k2, k3, k4 = jax.random.split(key, 4)
    bound1 = 1.0 / jnp.sqrt(2.0 * H)
    bound2 = 1.0 / jnp.sqrt(1.0 * H)
    w1 = jax.random.uniform(k1, (H, 2 * H), jnp.float32, -bound1, bound1)  # lin1.weight
    b1 = jax.random.uniform(k2, (H,), jnp.float32, -bound1, bound1)        # lin1.bias
    w2 = jax.random.uniform(k3, (1, H), jnp.float32, -bound2, bound2)      # lin2.weight
    b2 = jax.random.uniform(k4, (1,), jnp.float32, -bound2, bound2)        # lin2.bias
    return w1, b1, w2, b2


def _round_up(x, m):
    return ((x + m - 1) // m) * m


def edge_decoder_forward(z_drug, z_disease, edge_label_index, params):
    """z_drug [Nd,H], z_disease [Ns,H], edge_label_index [2,E] -> logits [E]."""
    w1, b1, w2, b2 = params
    row, col = edge_label_index[0], edge_label_index[1]
    H = z_drug.shape[-1]

    # Gather + concat glue (XLA), emitted directly in the feature-major [2H, E]
    # layout the kernel consumes (edges on the lane axis).
    # TODO(synk): fuse this gather into the kernel (scalar-prefetched indices +
    # node tables resident in VMEM) once a portable in-kernel dynamic gather is
    # available; kept as XLA glue so the kernel lowers on all TPU generations.
    zd = jnp.take(z_drug, row, axis=0)                       # [E, H]
    zs = jnp.take(z_disease, col, axis=0)                    # [E, H]
    z_fm = jnp.concatenate([zd, zs], axis=1).T.astype(jnp.float32)  # [2H, E]
    E = z_fm.shape[1]

    # Edge tile: as large as possible (amortizes per-grid-step overhead) while
    # keeping the double-buffered z tile at a few MiB -> safe within default
    # scoped VMEM on v5e (16 MiB) / v6e (32 MiB) / v7x (32 MiB).
    LANE = 128
    bytes_per_edge = 2 * H * 4
    te_cap = max(LANE, ((4 * 1024 * 1024) // bytes_per_edge) // LANE * LANE)
    TE = min(2048, te_cap, _round_up(E, LANE))
    E_pad = _round_up(E, TE)
    if E_pad != E:
        z_fm = jnp.pad(z_fm, ((0, 0), (0, E_pad - E)))

    # Parameters in the orientation the kernel wants.
    w1m = w1.astype(jnp.float32)                             # [H, 2H] (torch layout)
    b1c = b1.reshape(H, 1).astype(jnp.float32)               # bias column
    w2c = w2.reshape(H, 1).astype(jnp.float32)               # lin2.weight [1,H] -> column
    b2s = b2.reshape(1, 1).astype(jnp.float32)               # scalar -> SMEM

    out = pl.pallas_call(
        edge_decoder_kernel,
        out_shape=jax.ShapeDtypeStruct((1, E_pad), jnp.float32),
        grid=(E_pad // TE,),
        in_specs=[
            pl.BlockSpec((2 * H, TE), lambda i: (0, i)),              # z tile
            pl.BlockSpec((H, 2 * H), lambda i: (0, 0)),               # W1 (resident)
            pl.BlockSpec((H, 1), lambda i: (0, 0)),                   # b1 column
            pl.BlockSpec((H, 1), lambda i: (0, 0)),                   # W2 column
            pl.BlockSpec(memory_space=pltpu.MemorySpace.SMEM),        # b2 scalar
        ],
        out_specs=pl.BlockSpec((1, TE), lambda i: (0, i)),            # lane-dense output
        compiler_params=pltpu.CompilerParams(
            dimension_semantics=("parallel",)),
    )(z_fm, w1m, b1c, w2c, b2s)

    return out[0, :E]                                        # == z.view(-1)


def edge_decoder_reference(z_drug, z_disease, edge_label_index, params):
    w1, b1, w2, b2 = params
    row, col = edge_label_index[0], edge_label_index[1]
    z = jnp.concatenate([z_drug[row], z_disease[col]], axis=-1)
    z = jax.nn.sigmoid(z @ w1.T + b1)
    z = z @ w2.T + b2
    return z.reshape(-1)


if __name__ == "__main__":
    key = jax.random.PRNGKey(0)
    k_drug, k_dis, k_row, k_col, k_par = jax.random.split(key, 5)

    hidden_channels = 32
    n_drug, n_disease = 16, 24
    num_edges = 300                     # deliberately not a multiple of 128 (tail padding)

    z_drug = jax.random.normal(k_drug, (n_drug, hidden_channels), jnp.float32)
    z_disease = jax.random.normal(k_dis, (n_disease, hidden_channels), jnp.float32)
    row = jax.random.randint(k_row, (num_edges,), 0, n_drug, jnp.int32)
    col = jax.random.randint(k_col, (num_edges,), 0, n_disease, jnp.int32)
    edge_label_index = jnp.stack([row, col], axis=0)          # [2, E]

    params = init_edge_decoder_params(k_par, hidden_channels)

    out = edge_decoder_forward(z_drug, z_disease, edge_label_index, params)
    out = jax.block_until_ready(out)

    ref = edge_decoder_reference(z_drug, z_disease, edge_label_index, params)
    assert out.shape == (num_edges,)
    assert jnp.allclose(out, ref, atol=1e-5, rtol=1e-5)

    print("KERNEL_OK")
</pallas_src>

<mosaic_0001>
module attributes {stable_mosaic.version = 11 : i64} {
  func.func @edge_decoder_kernel(%arg0: i32, %arg1: memref<64x384xf32, #tpu.memory_space<vmem>>, %arg2: memref<32x64xf32, #tpu.memory_space<vmem>>, %arg3: memref<32x1xf32, #tpu.memory_space<vmem>>, %arg4: memref<32x1xf32, #tpu.memory_space<vmem>>, %arg5: memref<1x1xf32, #tpu.memory_space<smem>>, %arg6: memref<1x384xf32, #tpu.memory_space<vmem>>) attributes {dimension_semantics = [#tpu.dimension_semantics<parallel>], iteration_bounds = array<i64: 1>, scalar_prefetch = 0 : i64, scratch_operands = 0 : i64, tpu.core_type = #tpu.core_type<tc>, window_params = [{transform_indices = @transform_0, window_bounds = array<i64: 64, 384>}, {pipeline_mode = #tpu.pipeline_mode<synchronous>, transform_indices = @transform_1, window_bounds = array<i64: 32, 64>}, {pipeline_mode = #tpu.pipeline_mode<synchronous>, transform_indices = @transform_2, window_bounds = array<i64: 32, 1>}, {pipeline_mode = #tpu.pipeline_mode<synchronous>, transform_indices = @transform_3, window_bounds = array<i64: 32, 1>}, {transform_indices = @transform_4, window_bounds = array<i64: 1, 1>}, {transform_indices = @transform_5, window_bounds = array<i64: 1, 384>}]} {
    %c0 = arith.constant 0 : index
    %c0_0 = arith.constant 0 : index
    %0 = vector.load %arg2[%c0, %c0_0] : memref<32x64xf32, #tpu.memory_space<vmem>>, vector<32x64xf32>
    %c0_1 = arith.constant 0 : index
    %c0_2 = arith.constant 0 : index
    %1 = vector.load %arg1[%c0_1, %c0_2] : memref<64x384xf32, #tpu.memory_space<vmem>>, vector<64x384xf32>
    %cst = arith.constant dense<0.000000e+00> : vector<32x384xf32>
    %2 = tpu.matmul %0, %1, %cst {dimension_numbers = #tpu.dot_dimension_numbers<[1], [0], [0], [1], [0, 0, 1, 1], [], []>} : vector<32x64xf32>, vector<64x384xf32>, vector<32x384xf32> -> vector<32x384xf32>
    %c0_3 = arith.constant 0 : index
    %c0_4 = arith.constant 0 : index
    %3 = vector.load %arg3[%c0_3, %c0_4] : memref<32x1xf32, #tpu.memory_space<vmem>>, vector<32x1xf32>
    %4 = vector.broadcast %3 : vector<32x1xf32> to vector<32x384xf32>
    %5 = arith.addf %2, %4 : vector<32x384xf32>
    %6 = arith.negf %5 : vector<32x384xf32>
    %7 = math.exp %6 : vector<32x384xf32>
    %cst_5 = arith.constant 1.000000e+00 : f32
    %8 = vector.broadcast %cst_5 : f32 to vector<32x384xf32>
    %9 = arith.addf %8, %7 : vector<32x384xf32>
    %10 = arith.divf %8, %9 : vector<32x384xf32>
    %c0_6 = arith.constant 0 : index
    %c0_7 = arith.constant 0 : index
    %11 = vector.load %arg4[%c0_6, %c0_7] : memref<32x1xf32, #tpu.memory_space<vmem>>, vector<32x1xf32>
    %12 = vector.broadcast %11 : vector<32x1xf32> to vector<32x384xf32>
    %13 = arith.mulf %10, %12 : vector<32x384xf32>
    %cst_8 = arith.constant dense<0.000000e+00> : vector<384xf32>
    %14 = vector.multi_reduction <add>, %13, %cst_8 [0] : vector<32x384xf32> to vector<384xf32>
    %15 = vector.shape_cast %14 : vector<384xf32> to vector<1x384xf32>
    %c0_9 = arith.constant 0 : index
    %c0_10 = arith.constant 0 : index
    %16 = memref.load %arg5[%c0_9, %c0_10] : memref<1x1xf32, #tpu.memory_space<smem>>
    %17 = vector.broadcast %16 : f32 to vector<1x384xf32>
    %18 = arith.addf %15, %17 : vector<1x384xf32>
    %c0_11 = arith.constant 0 : index
    %c0_12 = arith.constant 0 : index
    %19 = vector.load %arg6[%c0_11, %c0_12] : memref<1x384xf32, #tpu.memory_space<vmem>>, vector<1x384xf32>
    tpu.vector_store %arg6[%c0_11, %c0_12], %18 {strides = array<i32>} : memref<1x384xf32, #tpu.memory_space<vmem>>, vector<1x384xf32>,
    return
  }
  func.func @transform_0(%arg0: i32) -> (i32, i32) {
    %c0_i32 = arith.constant 0 : i32
    %c0_i32_0 = arith.constant 0 : i32
    return %c0_i32, %arg0 : i32, i32
  }
  func.func @transform_1(%arg0: i32) -> (i32, i32) {
    %c0_i32 = arith.constant 0 : i32
    %c0_i32_0 = arith.constant 0 : i32
    %c0_i32_1 = arith.constant 0 : i32
    return %c0_i32, %c0_i32_0 : i32, i32
  }
  func.func @transform_2(%arg0: i32) -> (i32, i32) {
    %c0_i32 = arith.constant 0 : i32
    %c0_i32_0 = arith.constant 0 : i32
    %c0_i32_1 = arith.constant 0 : i32
    return %c0_i32, %c0_i32_0 : i32, i32
  }
  func.func @transform_3(%arg0: i32) -> (i32, i32) {
    %c0_i32 = arith.constant 0 : i32
    %c0_i32_0 = arith.constant 0 : i32
    %c0_i32_1 = arith.constant 0 : i32
    return %c0_i32, %c0_i32_0 : i32, i32
  }
  func.func @transform_4(%arg0: i32) -> (i32, i32) {
    %c0_i32 = arith.constant 0 : i32
    %c0_i32_0 = arith.constant 0 : i32
    %c0_i32_1 = arith.constant 0 : i32
    return %c0_i32, %c0_i32_0 : i32, i32
  }
  func.func @transform_5(%arg0: i32) -> (i32, i32) {
    %c0_i32 = arith.constant 0 : i32
    %c0_i32_0 = arith.constant 0 : i32
    return %c0_i32, %arg0 : i32, i32
  }
}

</mosaic_0001>

<llo_original>
// kernel: tpu_custom_call.1
$region0: #{tpu_custom_call.1}
  #allocation0 [shape = 'u32[]', space=smem, size = 0x4, offset = 0x4, fixed_abs, tag = 'smem constant byte address 0x4 - core index']
  #allocation1 [shape = 'u32[144,128]{1,0:T(1,128)}', space=vmem, size = 0x12000, scoped, tag = 'internal scratch']
  #allocation2 [shape = 'f32[1,1]{1,0:T(1,128)S(6)}', space=smem, size = 0x200, scoped, tag = 'scoped memory for tpu_custom_call.1']
  %s0 = inlined_call_operand.hbm [shape: f32[64,384], index: 0, kind: input, shape index: {}]
  %s1 = inlined_call_operand.vmem [shape: f32[32,64], index: 1, kind: input, shape index: {}]
  %s2 = inlined_call_operand.vmem [shape: f32[32,1], index: 2, kind: input, shape index: {}]
  %s3 = inlined_call_operand.vmem [shape: f32[32,1], index: 3, kind: input, shape index: {}]
  %s4 = inlined_call_operand.<no memory space> [shape: f32[1,1], index: 4, kind: input, shape index: {}]
  %s5 = inlined_call_operand.hbm [shape: f32[1,384], index: 5, kind: output, shape index: {}]
  %s6 = sld [smem:[#allocation0]]
  $region34: #{tpu_custom_call.1} parent=0
    _
  %s8 = ssub.s32 1, %s6
  %s9 = scalar_select 0, %s8, %s6
  %10 = sst [smem:[#allocation2]] %s4
  $region1: #{tpu_custom_call.1} parent=0
    #allocation3 [shape = 'u8[98304]{0}', space=vmem, size = 0x18000, scoped, tag = 'input window, operand 0, single buffered']
    #allocation4 [shape = 's32[1]{0}', space=sflag, size = 0x4, scoped, tag = 'scoped memory for tpu_custom_call.1']
    #allocation5 [shape = 's32[1]{0}', space=sflag, size = 0x4, scoped, tag = 'scoped memory for tpu_custom_call.1']
    #allocation6 [shape = 'u8[1536]{0}', space=vmem, size = 0x800, scoped, tag = 'output window, operand 0, single buffered']
    %11 = vsyncpa [#allocation4], 0
    %12 = vsyncpa [#allocation5], 0
    // Predicated region
    $region2: #{tpu_custom_call.1} parent=1 // pred_check
      _
    $region3: #{tpu_custom_call.1} parent=1 // pred_check_branch
      %14 = sbr.rel (0) target = $region5
    $region4: #{tpu_custom_call.1} parent=1 // pred_region
      %s16 = ssub.s32 3072, 3072
      %17 = vsyncadd [#allocation4], %s16
      %s18 = sshll.u32 [#allocation3], 4
      %s19 = int_to_ptr.vmem [resolvable:$true] %s18
      %24 = dma.hbm_to_vmem [thread:$0]  %s0, 3072, %s19, [#allocation4], 384, 384, 24
    $region5: #{tpu_custom_call.1} parent=1 // pred_fallthru
      _
    // Predicated region
    $region6: #{tpu_custom_call.1} parent=1 // pred_check
      _
    $region7: #{tpu_custom_call.1} parent=1 // pred_check_branch
      %26 = sbr.rel (0) target = $region9
    $region8: #{tpu_custom_call.1} parent=1 // pred_region
      _
    $region9: #{tpu_custom_call.1} parent=1 // pred_fallthru
      _
    // Predicated region
    $region10: #{tpu_custom_call.1} parent=1 // pred_check
      _
    $region11: #{tpu_custom_call.1} parent=1 // pred_check_branch
      %28 = sbr.rel (0) target = $region13
    $region12: #{tpu_custom_call.1} parent=1 // pred_region
      _
    $region13: #{tpu_custom_call.1} parent=1 // pred_fallthru
      _
    // Predicated region
    $region14: #{tpu_custom_call.1} parent=1 // pred_check
      _
    $region15: #{tpu_custom_call.1} parent=1 // pred_check_branch
      %30 = sbr.rel (0) target = $region17
    $region16: #{tpu_custom_call.1} parent=1 // pred_region
      _
    $region17: #{tpu_custom_call.1} parent=1 // pred_fallthru
      _
    // Predicated region
    $region18: #{tpu_custom_call.1} parent=1 // pred_check
      _
    $region19: #{tpu_custom_call.1} parent=1 // pred_check_branch
      %32 = sbr.rel (0) target = $region21
    $region20: #{tpu_custom_call.1} parent=1 // pred_region
      _
    $region21: #{tpu_custom_call.1} parent=1 // pred_fallthru
      _
    // Predicated region
    $region22: #{tpu_custom_call.1} parent=1 // pred_check
      _
    $region23: #{tpu_custom_call.1} parent=1 // pred_check_branch
      %34 = sbr.rel (0) target = $region25
    $region24: #{tpu_custom_call.1} parent=1 // pred_region
      %35 = dma.done [#allocation4], 3072
    $region25: #{tpu_custom_call.1} parent=1 // pred_fallthru
      _
    %v36 = vld [vmem:[%s1] sm:$0xff]
    %v37 = vld [vmem:[%s1 + $0x8] sm:$0xff]
    %v38 = vld [vmem:[%s1 + $0x10] sm:$0xff]
    %v39 = vld [vmem:[%s1 + $0x18] sm:$0xff]
    %v40 = vld [vmem:[#allocation3] sm:$0xff]
    %v41 = vld [vmem:[#allocation3 + $0x8] sm:$0xff]
    %v42 = vld [vmem:[#allocation3 + $0x10] sm:$0xff]
    %v43 = vld [vmem:[#allocation3 + $0x18] sm:$0xff]
    %v44 = vld [vmem:[#allocation3 + $0x20] sm:$0xff]
    %v45 = vld [vmem:[#allocation3 + $0x28] sm:$0xff]
    %v46 = vld [vmem:[#allocation3 + $0x30] sm:$0xff]
    %v47 = vld [vmem:[#allocation3 + $0x38] sm:$0xff]
    %v48 = vld [vmem:[#allocation3 + $0x40] sm:$0xff]
    %v49 = vld [vmem:[#allocation3 + $0x48] sm:$0xff]
    %v50 = vld [vmem:[#allocation3 + $0x50] sm:$0xff]
    %v51 = vld [vmem:[#allocation3 + $0x58] sm:$0xff]
    %v52 = vld [vmem:[#allocation3 + $0x60] sm:$0xff]
    %v53 = vld [vmem:[#allocation3 + $0x68] sm:$0xff]
    %v54 = vld [vmem:[#allocation3 + $0x70] sm:$0xff]
    %v55 = vld [vmem:[#allocation3 + $0x78] sm:$0xff]
    %v56 = vld [vmem:[#allocation3 + $0x80] sm:$0xff]
    %v57 = vld [vmem:[#allocation3 + $0x88] sm:$0xff]
    %v58 = vld [vmem:[#allocation3 + $0x90] sm:$0xff]
    %v59 = vld [vmem:[#allocation3 + $0x98] sm:$0xff]
    %v60 = vld [vmem:[#allocation3 + $0xa0] sm:$0xff]
    %v61 = vld [vmem:[#allocation3 + $0xa8] sm:$0xff]
    %v62 = vld [vmem:[#allocation3 + $0xb0] sm:$0xff]
    %v63 = vld [vmem:[#allocation3 + $0xb8] sm:$0xff]
    %v64 = vld [vmem:[%s2] sm:$0xff]
    %v65 = vld [vmem:[%s2 + $0x8] sm:$0xff]
    %v66 = vld [vmem:[%s2 + $0x10] sm:$0xff]
    %v67 = vld [vmem:[%s2 + $0x18] sm:$0xff]
    %69 = vset.pattern.permute.xlu0 0
    %70 = vperm.xlu0 %69, %v64
    %v71 = vpop.permute.xlu0 %70
    %74 = vset.pattern.permute.xlu0 0
    %75 = vperm.xlu0 %74, %v65
    %v76 = vpop.permute.xlu0 %75
    %79 = vset.pattern.permute.xlu0 0
    %80 = vperm.xlu0 %79, %v66
    %v81 = vpop.permute.xlu0 %80
    %84 = vset.pattern.permute.xlu0 0
    %85 = vperm.xlu0 %84, %v67
    %v86 = vpop.permute.xlu0 %85
    %vm88 = vcmask 523264
    %v90 = vsel %vm88, %v36, 0
    %v93 = vsel %vm88, %v37, 0
    %v96 = vsel %vm88, %v38, 0
    %v99 = vsel %vm88, %v39, 0
    %101 = vmatprep.subr.mxu0 %v41
    %102 = vmatpush1.msra.mxu0 %v40
    %103 = vmatprep.subr.mxu0 %v44
    %104 = vmatpush1.msra.mxu0 %v43
    %105 = vmatprep.subr.mxu0 %v47
    %106 = vmatpush1.msra.mxu0 %v46
    %107 = vmatprep.subr.mxu0 %v50
    %108 = vmatpush1.msra.mxu0 %v49
    %109 = vmatprep.subr.mxu0 %v53
    %110 = vmatpush1.msra.mxu0 %v52
    %111 = vmatprep.subr.mxu0 %v56
    %112 = vmatpush1.msra.mxu0 %v55
    %113 = vmatprep.subr.mxu0 %v59
    %114 = vmatpush1.msra.mxu0 %v58
    %115 = vmatprep.subr.mxu0 %v62
    %116 = vmatpush1.msra.mxu0 %v61
    %117 = vmatprep.subr.mxu0 0.0
    %118 = vmatpush1.msra.mxu0 0.0
    %119 = vmatprep.subr.mxu0 0.0
    %120 = vmatpush1.msra.mxu0 0.0
    %121 = vmatprep.subr.mxu0 0.0
    %122 = vmatpush1.msra.mxu0 0.0
    %123 = vmatprep.subr.mxu0 0.0
    %124 = vmatpush1.msra.mxu0 0.0
    %125 = vmatprep.subr.mxu0 0.0
    %126 = vmatpush1.msra.mxu0 0.0
    %127 = vmatprep.subr.mxu0 0.0
    %128 = vmatpush1.msra.mxu0 0.0
    %129 = vmatprep.subr.mxu0 0.0
    %130 = vmatpush1.msra.mxu0 0.0
    %131 = vmatprep.subr.mxu0 0.0
    %132 = vmatpush1.msra.mxu0 0.0
    %133 = vmatprep.subr.mxu0 0.0
    %134 = vmatpush1.msra.mxu0 0.0
    %135 = vmatprep.subr.mxu0 0.0
    %136 = vmatpush1.msra.mxu0 0.0
    %137 = vmatprep.subr.mxu0 0.0
    %138 = vmatpush1.msra.mxu0 0.0
    %139 = vmatprep.subr.mxu0 0.0
    %140 = vmatpush1.msra.mxu0 0.0
    %141 = vmatprep.subr.mxu0 0.0
    %142 = vmatpush1.msra.mxu0 0.0
    %143 = vmatprep.subr.mxu0 0.0
    %144 = vmatpush1.msra.mxu0 0.0
    %145 = vmatprep.subr.mxu0 0.0
    %146 = vmatpush1.msra.mxu0 0.0
    %147 = vmatprep.subr.mxu0 0.0
    %148 = vmatpush1.msra.mxu0 0.0
    %149 = vmatprep.subr.mxu0 0.0
    %150 = vmatpush1.msra.mxu0 0.0
    %151 = vmatprep.subr.mxu0 0.0
    %152 = vmatpush1.msra.mxu0 0.0
    %153 = vmatprep.subr.mxu0 0.0
    %154 = vmatpush1.msra.mxu0 0.0
    %155 = vmatprep.subr.mxu0 0.0
    %156 = vmatpush1.msra.mxu0 0.0
    %157 = vmatprep.subr.mxu0 0.0
    %158 = vmatpush1.msra.mxu0 0.0
    %159 = vmatprep.subr.mxu0 0.0
    %160 = vmatpush1.msra.mxu0 0.0
    %161 = vmatprep.subr.mxu0 0.0
    %162 = vmatpush1.msra.mxu0 0.0
    %163 = vmatprep.subr.mxu0 0.0
    %164 = vmatpush1.msra.mxu0 0.0
    %165 = vmatprep.mubr.f32.mxu0 0.0
    %166 = vmatmul.mubr.f32.gmra.mrb[0].mxu0 %v90
    %v167 = vpop.f32.mrb[0].mxu0
    %v168 = vadd.f32 %v71, %v167
    %v169 = vpop.f32.mrb[0].mxu0
    %v170 = vadd.f32 %v71, %v169
    %171 = vmatprep.mubr.f32.mxu0 0.0
    %172 = vmatmul.mubr.f32.gmra.mrb[0].mxu0 %v93
    %v173 = vpop.f32.mrb[0].mxu0
    %v174 = vadd.f32 %v76, %v173
    %v175 = vpop.f32.mrb[0].mxu0
    %v176 = vadd.f32 %v76, %v175
    %177 = vmatprep.mubr.f32.mxu0 0.0
    %178 = vmatmul.mubr.f32.gmra.mrb[0].mxu0 %v96
    %v179 = vpop.f32.mrb[0].mxu0
    %v180 = vadd.f32 %v81, %v179
    %v181 = vpop.f32.mrb[0].mxu0
    %v182 = vadd.f32 %v81, %v181
    %183 = vmatprep.mubr.f32.mxu0 0.0
    %184 = vmatmul.mubr.f32.gmra.mrb[0].mxu0 %v99
    %v185 = vpop.f32.mrb[0].mxu0
    %v186 = vadd.f32 %v86, %v185
    %v187 = vpop.f32.mrb[0].mxu0
    %v188 = vadd.f32 %v86, %v187
    %189 = vdwg.mxu0
    %190 = vmatprep.subr.mxu0 0.0
    %191 = vmatpush1.msra.mxu0 %v42
    %192 = vmatprep.subr.mxu0 0.0
    %193 = vmatpush1.msra.mxu0 %v45
    %194 = vmatprep.subr.mxu0 0.0
    %195 = vmatpush1.msra.mxu0 %v48
    %196 = vmatprep.subr.mxu0 0.0
    %197 = vmatpush1.msra.mxu0 %v51
    %198 = vmatprep.subr.mxu0 0.0
    %199 = vmatpush1.msra.mxu0 %v54
    %200 = vmatprep.subr.mxu0 0.0
    %201 = vmatpush1.msra.mxu0 %v57
    %202 = vmatprep.subr.mxu0 0.0
    %203 = vmatpush1.msra.mxu0 %v60
    %204 = vmatprep.subr.mxu0 0.0
    %205 = vmatpush1.msra.mxu0 %v63
    %206 = vmatprep.subr.mxu0 0.0
    %207 = vmatpush1.msra.mxu0 0.0
    %208 = vmatprep.subr.mxu0 0.0
    %209 = vmatpush1.msra.mxu0 0.0
    %210 = vmatprep.subr.mxu0 0.0
    %211 = vmatpush1.msra.mxu0 0.0
    %212 = vmatprep.subr.mxu0 0.0
    %213 = vmatpush1.msra.mxu0 0.0
    %214 = vmatprep.subr.mxu0 0.0
    %215 = vmatpush1.msra.mxu0 0.0
    %216 = vmatprep.subr.mxu0 0.0
    %217 = vmatpush1.msra.mxu0 0.0
    %218 = vmatprep.subr.mxu0 0.0
    %219 = vmatpush1.msra.mxu0 0.0
    %220 = vmatprep.subr.mxu0 0.0
    %221 = vmatpush1.msra.mxu0 0.0
    %222 = vmatprep.subr.mxu0 0.0
    %223 = vmatpush1.msra.mxu0 0.0
    %224 = vmatprep.subr.mxu0 0.0
    %225 = vmatpush1.msra.mxu0 0.0
    %226 = vmatprep.subr.mxu0 0.0
    %227 = vmatpush1.msra.mxu0 0.0
    %228 = vmatprep.subr.mxu0 0.0
    %229 = vmatpush1.msra.mxu0 0.0
    %230 = vmatprep.subr.mxu0 0.0
    %231 = vmatpush1.msra.mxu0 0.0
    %232 = vmatprep.subr.mxu0 0.0
    %233 = vmatpush1.msra.mxu0 0.0
    %234 = vmatprep.subr.mxu0 0.0
    %235 = vmatpush1.msra.mxu0 0.0
    %236 = vmatprep.subr.mxu0 0.0
    %237 = vmatpush1.msra.mxu0 0.0
    %238 = vmatprep.subr.mxu0 0.0
    %239 = vmatpush1.msra.mxu0 0.0
    %240 = vmatprep.subr.mxu0 0.0
    %241 = vmatpush1.msra.mxu0 0.0
    %242 = vmatprep.subr.mxu0 0.0
    %243 = vmatpush1.msra.mxu0 0.0
    %244 = vmatprep.subr.mxu0 0.0
    %245 = vmatpush1.msra.mxu0 0.0
    %246 = vmatprep.subr.mxu0 0.0
    %247 = vmatpush1.msra.mxu0 0.0
    %248 = vmatprep.subr.mxu0 0.0
    %249 = vmatpush1.msra.mxu0 0.0
    %250 = vmatprep.subr.mxu0 0.0
    %251 = vmatpush1.msra.mxu0 0.0
    %252 = vmatprep.subr.mxu0 0.0
    %253 = vmatpush1.msra.mxu0 0.0
    %254 = vmatprep.mubr.f32.mxu0 0.0
    %255 = vmatmul.mubr.f32.gmra.mrb[0].mxu0 %v90
    %v256 = vpop.f32.mrb[0].mxu0
    %v257 = vadd.f32 %v71, %v256
    %v258 = vpop.f32.mrb[0].mxu0
    %259 = vmatprep.mubr.f32.mxu0 0.0
    %260 = vmatmul.mubr.f32.gmra.mrb[0].mxu0 %v93
    %v261 = vpop.f32.mrb[0].mxu0
    %v262 = vadd.f32 %v76, %v261
    %v263 = vpop.f32.mrb[0].mxu0
    %264 = vmatprep.mubr.f32.mxu0 0.0
    %265 = vmatmul.mubr.f32.gmra.mrb[0].mxu0 %v96
    %v266 = vpop.f32.mrb[0].mxu0
    %v267 = vadd.f32 %v81, %v266
    %v268 = vpop.f32.mrb[0].mxu0
    %269 = vmatprep.mubr.f32.mxu0 0.0
    %270 = vmatmul.mubr.f32.gmra.mrb[0].mxu0 %v99
    %v271 = vpop.f32.mrb[0].mxu0
    %v272 = vadd.f32 %v86, %v271
    %v273 = vpop.f32.mrb[0].mxu0
    %274 = vdwg.mxu0
    %v275 = vxor.u32 %v168, 2147483648
    %v276 = vxor.u32 %v170, 2147483648
    %v277 = vxor.u32 %v257, 2147483648
    %v278 = vxor.u32 %v174, 2147483648
    %v279 = vxor.u32 %v176, 2147483648
    %v280 = vxor.u32 %v262, 2147483648
    %v281 = vxor.u32 %v180, 2147483648
    %v282 = vxor.u32 %v182, 2147483648
    %v283 = vxor.u32 %v267, 2147483648
    %v284 = vxor.u32 %v186, 2147483648
    %v285 = vxor.u32 %v188, 2147483648
    %v286 = vxor.u32 %v272, 2147483648
    %v287 = vmul.f32 %v275, 1.442695
    %v288 = vpow.pop %v287
    %v289 = vmul.f32 %v276, 1.442695
    %v290 = vpow.pop %v289
    %v291 = vmul.f32 %v277, 1.442695
    %v292 = vpow.pop %v291
    %v293 = vmul.f32 %v278, 1.442695
    %v294 = vpow.pop %v293
    %v295 = vmul.f32 %v279, 1.442695
    %v296 = vpow.pop %v295
    %v297 = vmul.f32 %v280, 1.442695
    %v298 = vpow.pop %v297
    %v299 = vmul.f32 %v281, 1.442695
    %v300 = vpow.pop %v299
    %v301 = vmul.f32 %v282, 1.442695
    %v302 = vpow.pop %v301
    %v303 = vmul.f32 %v283, 1.442695
    %v304 = vpow.pop %v303
    %v305 = vmul.f32 %v284, 1.442695
    %v306 = vpow.pop %v305
    %v307 = vmul.f32 %v285, 1.442695
    %v308 = vpow.pop %v307
    %v309 = vmul.f32 %v286, 1.442695
    %v310 = vpow.pop %v309
    %v311 = vadd.f32 %v288, 1.0
    %v312 = vadd.f32 %v290, 1.0
    %v313 = vadd.f32 %v292, 1.0
    %v314 = vadd.f32 %v294, 1.0
    %v315 = vadd.f32 %v296, 1.0
    %v316 = vadd.f32 %v298, 1.0
    %v317 = vadd.f32 %v300, 1.0
    %v318 = vadd.f32 %v302, 1.0
    %v319 = vadd.f32 %v304, 1.0
    %v320 = vadd.f32 %v306, 1.0
    %v321 = vadd.f32 %v308, 1.0
    %v322 = vadd.f32 %v310, 1.0
    %v323 = vrcp.pop %v311
    %v324 = vmul.f32 1.0, %v323
    %v325 = vrcp.pop %v312
    %v326 = vmul.f32 1.0, %v325
    %v327 = vrcp.pop %v313
    %v328 = vmul.f32 1.0, %v327
    %v329 = vrcp.pop %v314
    %v330 = vmul.f32 1.0, %v329
    %v331 = vrcp.pop %v315
    %v332 = vmul.f32 1.0, %v331
    %v333 = vrcp.pop %v316
    %v334 = vmul.f32 1.0, %v333
    %v335 = vrcp.pop %v317
    %v336 = vmul.f32 1.0, %v335
    %v337 = vrcp.pop %v318
    %v338 = vmul.f32 1.0, %v337
    %v339 = vrcp.pop %v319
    %v340 = vmul.f32 1.0, %v339
    %v341 = vrcp.pop %v320
    %v342 = vmul.f32 1.0, %v341
    %v343 = vrcp.pop %v321
    %v344 = vmul.f32 1.0, %v343
    %v345 = vrcp.pop %v322
    %v346 = vmul.f32 1.0, %v345
    %v347 = vld [vmem:[%s3] sm:$0xff]
    %v348 = vld [vmem:[%s3 + $0x8] sm:$0xff]
    %v349 = vld [vmem:[%s3 + $0x10] sm:$0xff]
    %v350 = vld [vmem:[%s3 + $0x18] sm:$0xff]
    %352 = vset.pattern.permute.xlu0 0
    %353 = vperm.xlu0 %352, %v347
    %v354 = vpop.permute.xlu0 %353
    %357 = vset.pattern.permute.xlu0 0
    %358 = vperm.xlu0 %357, %v348
    %v359 = vpop.permute.xlu0 %358
    %362 = vset.pattern.permute.xlu0 0
    %363 = vperm.xlu0 %362, %v349
    %v364 = vpop.permute.xlu0 %363
    %367 = vset.pattern.permute.xlu0 0
    %368 = vperm.xlu0 %367, %v350
    %v369 = vpop.permute.xlu0 %368
    %v371 = vmul.f32 %v324, %v354
    %v372 = vmul.f32 %v326, %v354
    %v373 = vmul.f32 %v328, %v354
    %v374 = vmul.f32 %v330, %v359
    %v375 = vmul.f32 %v332, %v359
    %v376 = vmul.f32 %v334, %v359
    %v377 = vmul.f32 %v336, %v364
    %v378 = vmul.f32 %v338, %v364
    %v379 = vmul.f32 %v340, %v364
    %v380 = vmul.f32 %v342, %v369
    %v381 = vmul.f32 %v344, %v369
    %v382 = vmul.f32 %v346, %v369
    %v383 = vadd.f32 %v371, %v374
    %v384 = vadd.f32 %v383, %v377
    %v385 = vadd.f32 %v384, %v380
    %v386 = vrot.slane %v385, 4
    %v387 = vadd.f32 %v385, %v386
    %v388 = vrot.slane %v387, 2
    %v389 = vadd.f32 %v387, %v388
    %v390 = vrot.slane %v389, 1
    %v391 = vadd.f32 %v389, %v390
    %v392 = vadd.f32 %v372, %v375
    %v393 = vadd.f32 %v392, %v378
    %v394 = vadd.f32 %v393, %v381
    %v395 = vrot.slane %v394, 4
    %v396 = vadd.f32 %v394, %v395
    %v397 = vrot.slane %v396, 2
    %v398 = vadd.f32 %v396, %v397
    %v399 = vrot.slane %v398, 1
    %v400 = vadd.f32 %v398, %v399
    %v401 = vadd.f32 %v373, %v376
    %v402 = vadd.f32 %v401, %v379
    %v403 = vadd.f32 %v402, %v382
    %v404 = vrot.slane %v403, 4
    %v405 = vadd.f32 %v403, %v404
    %v406 = vrot.slane %v405, 2
    %v407 = vadd.f32 %v405, %v406
    %v408 = vrot.slane %v407, 1
    %v409 = vadd.f32 %v407, %v408
    %s410 = sld [smem:[#allocation2]]
    %v411 = vstv %s410
    %v412 = vadd.f32 %v391, %v411
    %v413 = vadd.f32 %v400, %v411
    %v414 = vadd.f32 %v409, %v411
    %v418 = vcombine.low %v412, %v413
    %v420 = vunpack.c.l.s4 1966171168
    %v421 = vunpack.c.0.s8 %v420
    %v422 = vlaneseq
    %v423 = vshrl.u32 %v422, 7
    %v424 = vsub.s32 %v421, %v423
    %v425 = vrot.slane %v418, %v424
    %v427 = vunpack.c.l.s4 1966171168
    %v428 = vunpack.c.0.s8 %v427
    %v429 = vlaneseq
    %v430 = vshrl.u32 %v429, 7
    %v431 = vsub.s32 %v428, %v430
    %v432 = vrot.slane %v414, %v431
    %v433 = vcombine.low %v425, %v432
    %v435 = vunpack.c.l.s4 1966171168
    %v436 = vunpack.c.0.s8 %v435
    %v437 = vlaneseq
    %v438 = vshrl.u32 %v437, 7
    %v439 = vsub.s32 %v436, %v438
    %v440 = vrot.slane %v433, %v439
    %v442 = vlaneseq
    %vm443 = vcmp.ge.s32.totalorder %v442, 0
    %vm444 = vcmp.lt.s32.totalorder %v442, 384
    %vm445 = vmand %vm443, %vm444
    %446 = vst.msk [vmem:[#allocation6] sm:$0x7] %vm445, %v440
    // Predicated region
    $region26: #{tpu_custom_call.1} parent=1 // pred_check
      _
    $region27: #{tpu_custom_call.1} parent=1 // pred_check_branch
      %448 = sbr.rel (0) target = $region29
    $region28: #{tpu_custom_call.1} parent=1 // pred_region
      %s450 = ssub.s32 48, 48
      %451 = vsyncadd [#allocation5], %s450
      %s453 = sshll.u32 [#allocation6], 4
      %s454 = int_to_ptr.vmem [resolvable:$true] %s453
      %456 = dma.vmem_to_hbm [thread:$0]  %s454, 48, %s5, [#allocation5]
    $region29: #{tpu_custom_call.1} parent=1 // pred_fallthru
      _
    // Predicated region
    $region30: #{tpu_custom_call.1} parent=1 // pred_check
      _
    $region31: #{tpu_custom_call.1} parent=1 // pred_check_branch
      %458 = sbr.rel (0) target = $region33
    $region32: #{tpu_custom_call.1} parent=1 // pred_region
      %459 = dma.done [#allocation5], 48
    $region33: #{tpu_custom_call.1} parent=1 // pred_fallthru
      _
    %460 = vsyncpa [#allocation4], 1
    %461 = vsyncpa [#allocation5], 1

</llo_original>
